<compile_context>
chip_gen: v6e
topology: v6e:2x2x1
jax: 0.10.0
libtpu: 0.0.40
codegen_flags: <defaults>
</compile_context>

<pallas_src>
import functools

import jax
import jax.numpy as jnp
from jax.experimental import pallas as pl
from jax.experimental.pallas import tpu as pltpu


def _pick_block_rows(n, c, in_itemsize, max_rows=1024,
                     vmem_budget_bytes=40 * 1024 * 1024):
    """Largest multiple-of-16 row tile fitting the VMEM budget (v7x-safe)."""
    c_pad = ((c + 127) // 128) * 128  # lane padding of each (TB, C) block
    # 2 inputs x 2 pipeline buffers (input dtype) + ~4 f32 compute temporaries.
    bytes_per_row = c_pad * (4 * in_itemsize + 4 * 4)
    rows = int(vmem_budget_bytes // bytes_per_row)
    rows = min(rows, max_rows)
    n_pad16 = ((n + 15) // 16) * 16
    rows = min(rows, n_pad16)            # no point tiling past the batch
    rows = max(16, (rows // 16) * 16)    # multiple of 16 (bf16 sublane tile)
    return rows


def _nll_smooth_kernel(x_ref, t_ref, out_ref, *, confidence, smoothing, inv_c,
                       n_rows, block_rows, needs_mask):
    x = x_ref[...].astype(jnp.float32)          # (TB, C)
    t = t_ref[...].astype(jnp.float32)          # (TB, C)

    if needs_mask:  # static Python flag: only emitted for ragged batches
        i = pl.program_id(0)
        row = jax.lax.broadcasted_iota(jnp.int32, (x.shape[0], 1), 0)
        valid = (i * block_rows + row) < n_rows  # (TB, 1) bool
        x = jnp.where(valid, x, 0.0)
        t = jnp.where(valid, t, 0.0)

    # log-softmax over the class (lane) axis.
    m = jnp.max(x, axis=-1, keepdims=True)                        # (TB, 1)
    z = x - m
    sum_z = jnp.sum(z, axis=-1, keepdims=True)                    # (TB, 1)
    lse = jnp.log(jnp.sum(jnp.exp(z), axis=-1, keepdims=True))    # (TB, 1)
    logprobs = z - lse                                            # (TB, C)

    nll = -jnp.sum(logprobs * t, axis=-1, keepdims=True)          # (TB, 1)
    smooth = lse - sum_z * inv_c      # == -mean(logprobs, -1)      (TB, 1)
    loss = confidence * nll + smoothing * smooth                  # (TB, 1)

    if needs_mask:
        loss = jnp.where(valid, loss, 0.0)

    # Per-block partial sum, broadcast across 128 lanes for an unmasked store.
    partial = jnp.sum(loss, axis=0, keepdims=True)                # (1, 1)
    out_ref[...] = jnp.broadcast_to(partial, out_ref.shape)


def nll_multilabel_smooth(x, target, smoothing=0.1, block_rows=None):
    """Pallas TPU implementation of NLLMultiLabelSmooth.forward (training mode).

    x:      (N, C) logits (f32 or bf16)
    target: (N, C) multi-label / soft targets (f32 or bf16)
    returns scalar float32 loss.
    """
    assert x.shape == target.shape and x.ndim == 2
    N, C = x.shape
    confidence = 1.0 - smoothing

    if block_rows is None:
        block_rows = _pick_block_rows(N, C, jnp.dtype(x.dtype).itemsize)
    num_blocks = pl.cdiv(N, block_rows)
    needs_mask = (N % block_rows) != 0

    kernel = functools.partial(
        _nll_smooth_kernel,
        confidence=float(confidence),
        smoothing=float(smoothing),
        inv_c=float(1.0 / C),
        n_rows=N,
        block_rows=block_rows,
        needs_mask=needs_mask,
    )

    partials = pl.pallas_call(
        kernel,
        out_shape=jax.ShapeDtypeStruct((num_blocks, 1, 128), jnp.float32),
        grid=(num_blocks,),
        in_specs=[
            pl.BlockSpec((block_rows, C), lambda i: (i, 0)),
            pl.BlockSpec((block_rows, C), lambda i: (i, 0)),
        ],
        out_specs=pl.BlockSpec((1, 1, 128), lambda i: (i, 0, 0)),
        compiler_params=pltpu.CompilerParams(
            # Independent per-block partials -> grid axis can shard across
            # TensorCores on v7x; neutral on v5e/v6e.
            dimension_semantics=("parallel",),
            vmem_limit_bytes=48 * 1024 * 1024,
        ),
    )(x, target)

    # Tiny final reduction + mean in plain JAX (keeps the grid axis parallel).
    return jnp.sum(partials[:, 0, 0]) * jnp.float32(1.0 / N)


def _reference(x, target, smoothing=0.1):
    x = x.astype(jnp.float32)
    target = target.astype(jnp.float32)
    logprobs = jax.nn.log_softmax(x, axis=-1)
    nll = jnp.sum(-logprobs * target, axis=-1)
    smooth = -jnp.mean(logprobs, axis=-1)
    loss = (1.0 - smoothing) * nll + smoothing * smooth
    return jnp.mean(loss)


if __name__ == "__main__":
    key = jax.random.PRNGKey(0)
    kx, kt = jax.random.split(key)

    # Main check: small aligned shapes (batch=16, classes=32), auto tile size.
    N, C = 16, 32
    x = jax.random.normal(kx, (N, C), dtype=jnp.float32)
    labels_a = jax.random.randint(kt, (N,), 0, C)
    labels_b = jax.random.randint(jax.random.fold_in(kt, 1), (N,), 0, C)
    lam = 0.7
    target = lam * jax.nn.one_hot(labels_a, C) + (1.0 - lam) * jax.nn.one_hot(labels_b, C)

    loss = jax.block_until_ready(nll_multilabel_smooth(x, target, smoothing=0.1))
    ref = _reference(x, target, smoothing=0.1)
    assert jnp.allclose(loss, ref, atol=1e-5, rtol=1e-5), (loss, ref)

    # Ragged-batch check: N not a multiple of block_rows exercises the row mask.
    N2, C2 = 24, 32
    x2 = jax.random.normal(jax.random.fold_in(kx, 2), (N2, C2), dtype=jnp.float32)
    t2 = jax.nn.softmax(jax.random.normal(jax.random.fold_in(kt, 3), (N2, C2)), axis=-1)
    loss2 = jax.block_until_ready(
        nll_multilabel_smooth(x2, t2, smoothing=0.1, block_rows=16))
    ref2 = _reference(x2, t2, smoothing=0.1)
    assert jnp.allclose(loss2, ref2, atol=1e-5, rtol=1e-5), (loss2, ref2)

    print("KERNEL_OK")
</pallas_src>

<mosaic_0001>
module attributes {stable_mosaic.version = 11 : i64} {
  func.func @_nll_smooth_kernel(%arg0: i32, %arg1: memref<16x32xf32, #tpu.memory_space<vmem>>, %arg2: memref<16x32xf32, #tpu.memory_space<vmem>>, %arg3: memref<1x1x128xf32, #tpu.memory_space<vmem>>) attributes {dimension_semantics = [#tpu.dimension_semantics<parallel>], iteration_bounds = array<i64: 1>, scalar_prefetch = 0 : i64, scratch_operands = 0 : i64, tpu.core_type = #tpu.core_type<tc>, window_params = [{transform_indices = @transform_0, window_bounds = array<i64: 16, 32>}, {transform_indices = @transform_1, window_bounds = array<i64: 16, 32>}, {transform_indices = @transform_2, window_bounds = array<i64: 1, 1, 128>}]} {
    %c0 = arith.constant 0 : index
    %c0_0 = arith.constant 0 : index
    %0 = vector.load %arg1[%c0, %c0_0] : memref<16x32xf32, #tpu.memory_space<vmem>>, vector<16x32xf32>
    %c0_1 = arith.constant 0 : index
    %c0_2 = arith.constant 0 : index
    %1 = vector.load %arg2[%c0_1, %c0_2] : memref<16x32xf32, #tpu.memory_space<vmem>>, vector<16x32xf32>
    %cst = arith.constant dense<0xFF800000> : vector<16xf32>
    %2 = vector.multi_reduction <maximumf>, %0, %cst [1] : vector<16x32xf32> to vector<16xf32>
    %3 = vector.shape_cast %2 : vector<16xf32> to vector<16x1xf32>
    %4 = vector.broadcast %3 : vector<16x1xf32> to vector<16x32xf32>
    %5 = arith.subf %0, %4 : vector<16x32xf32>
    %cst_3 = arith.constant dense<0.000000e+00> : vector<16xf32>
    %6 = vector.multi_reduction <add>, %5, %cst_3 [1] : vector<16x32xf32> to vector<16xf32>
    %7 = vector.shape_cast %6 : vector<16xf32> to vector<16x1xf32>
    %8 = math.exp %5 : vector<16x32xf32>
    %cst_4 = arith.constant dense<0.000000e+00> : vector<16xf32>
    %9 = vector.multi_reduction <add>, %8, %cst_4 [1] : vector<16x32xf32> to vector<16xf32>
    %10 = vector.shape_cast %9 : vector<16xf32> to vector<16x1xf32>
    %11 = math.log %10 : vector<16x1xf32>
    %12 = vector.broadcast %11 : vector<16x1xf32> to vector<16x32xf32>
    %13 = arith.subf %5, %12 : vector<16x32xf32>
    %14 = arith.mulf %13, %1 : vector<16x32xf32>
    %cst_5 = arith.constant dense<0.000000e+00> : vector<16xf32>
    %15 = vector.multi_reduction <add>, %14, %cst_5 [1] : vector<16x32xf32> to vector<16xf32>
    %16 = vector.shape_cast %15 : vector<16xf32> to vector<16x1xf32>
    %cst_6 = arith.constant 0.000000e+00 : f32
    %17 = vector.broadcast %cst_6 : f32 to vector<16x1xf32>
    %18 = arith.subf %17, %16 : vector<16x1xf32>
    %cst_7 = arith.constant 3.125000e-02 : f32
    %19 = vector.broadcast %cst_7 : f32 to vector<16x1xf32>
    %20 = arith.mulf %7, %19 : vector<16x1xf32>
    %21 = arith.subf %11, %20 : vector<16x1xf32>
    %cst_8 = arith.constant 0.899999976 : f32
    %22 = vector.broadcast %cst_8 : f32 to vector<16x1xf32>
    %23 = arith.mulf %22, %18 : vector<16x1xf32>
    %cst_9 = arith.constant 1.000000e-01 : f32
    %24 = vector.broadcast %cst_9 : f32 to vector<16x1xf32>
    %25 = arith.mulf %24, %21 : vector<16x1xf32>
    %26 = arith.addf %23, %25 : vector<16x1xf32>
    %cst_10 = arith.constant dense<0.000000e+00> : vector<1xf32>
    %27 = vector.multi_reduction <add>, %26, %cst_10 [0] : vector<16x1xf32> to vector<1xf32>
    %28 = vector.shape_cast %27 : vector<1xf32> to vector<1x1xf32>
    %29 = vector.shape_cast %28 : vector<1x1xf32> to vector<1x1x1xf32>
    %30 = vector.broadcast %29 : vector<1x1x1xf32> to vector<1x1x128xf32>
    %c0_11 = arith.constant 0 : index
    %c0_12 = arith.constant 0 : index
    %c0_13 = arith.constant 0 : index
    %31 = vector.load %arg3[%c0_11, %c0_12, %c0_13] : memref<1x1x128xf32, #tpu.memory_space<vmem>>, vector<1x1x128xf32>
    tpu.vector_store %arg3[%c0_11, %c0_12, %c0_13], %30 {strides = array<i32>} : memref<1x1x128xf32, #tpu.memory_space<vmem>>, vector<1x1x128xf32>,
    return
  }
  func.func @transform_0(%arg0: i32) -> (i32, i32) {
    %c0_i32 = arith.constant 0 : i32
    %c0_i32_0 = arith.constant 0 : i32
    return %arg0, %c0_i32 : i32, i32
  }
  func.func @transform_1(%arg0: i32) -> (i32, i32) {
    %c0_i32 = arith.constant 0 : i32
    %c0_i32_0 = arith.constant 0 : i32
    return %arg0, %c0_i32 : i32, i32
  }
  func.func @transform_2(%arg0: i32) -> (i32, i32, i32) {
    %c0_i32 = arith.constant 0 : i32
    %c0_i32_0 = arith.constant 0 : i32
    %c0_i32_1 = arith.constant 0 : i32
    return %arg0, %c0_i32, %c0_i32_0 : i32, i32, i32
  }
}

</mosaic_0001>

<llo_original>
// kernel: tpu_custom_call.1
$region0: #{tpu_custom_call.1}
  #allocation0 [shape = 'u32[]', space=smem, size = 0x4, offset = 0x4, fixed_abs, tag = 'smem constant byte address 0x4 - core index']
  #allocation1 [shape = 'u32[144,128]{1,0:T(1,128)}', space=vmem, size = 0x12000, scoped, tag = 'internal scratch']
  %s0 = inlined_call_operand.hbm [shape: f32[16,32], index: 0, kind: input, shape index: {}]
  %s1 = inlined_call_operand.hbm [shape: f32[16,32], index: 1, kind: input, shape index: {}]
  %s2 = inlined_call_operand.hbm [shape: f32[1,1,128], index: 2, kind: output, shape index: {}]
  %s3 = sld [smem:[#allocation0]]
  $region26: #{tpu_custom_call.1} parent=0
    _
  %s5 = ssub.s32 1, %s3
  %s6 = scalar_select 0, %s5, %s3
  $region1: #{tpu_custom_call.1} parent=0
    #allocation2 [shape = 'u8[8192]{0}', space=vmem, size = 0x2000, scoped, tag = 'input window, operand 0, single buffered']
    #allocation3 [shape = 's32[1]{0}', space=sflag, size = 0x4, scoped, tag = 'scoped memory for tpu_custom_call.1']
    #allocation4 [shape = 's32[1]{0}', space=sflag, size = 0x4, scoped, tag = 'scoped memory for tpu_custom_call.1']
    #allocation5 [shape = 'u8[8192]{0}', space=vmem, size = 0x2000, scoped, tag = 'input window, operand 1, single buffered']
    #allocation6 [shape = 's32[1]{0}', space=sflag, size = 0x4, scoped, tag = 'scoped memory for tpu_custom_call.1']
    #allocation7 [shape = 'u8[512]{0}', space=vmem, size = 0x400, scoped, tag = 'output window, operand 0, single buffered']
    %7 = vsyncpa [#allocation3], 0
    %8 = vsyncpa [#allocation6], 0
    %9 = vsyncpa [#allocation4], 0
    // Predicated region
    $region2: #{tpu_custom_call.1} parent=1 // pred_check
      _
    $region3: #{tpu_custom_call.1} parent=1 // pred_check_branch
      %11 = sbr.rel (0) target = $region5
    $region4: #{tpu_custom_call.1} parent=1 // pred_region
      %s13 = ssub.s32 256, 256
      %14 = vsyncadd [#allocation3], %s13
      %s15 = sshll.u32 [#allocation2], 4
      %s16 = int_to_ptr.vmem [resolvable:$true] %s15
      %21 = dma.hbm_to_vmem [thread:$0]  %s0, 256, %s16, [#allocation3], 128, 128, 8
    $region5: #{tpu_custom_call.1} parent=1 // pred_fallthru
      _
    // Predicated region
    $region6: #{tpu_custom_call.1} parent=1 // pred_check
      _
    $region7: #{tpu_custom_call.1} parent=1 // pred_check_branch
      %23 = sbr.rel (0) target = $region9
    $region8: #{tpu_custom_call.1} parent=1 // pred_region
      %s25 = ssub.s32 256, 256
      %26 = vsyncadd [#allocation6], %s25
      %s27 = sshll.u32 [#allocation5], 4
      %s28 = int_to_ptr.vmem [resolvable:$true] %s27
      %33 = dma.hbm_to_vmem [thread:$0]  %s1, 256, %s28, [#allocation6], 128, 128, 8
    $region9: #{tpu_custom_call.1} parent=1 // pred_fallthru
      _
    // Predicated region
    $region10: #{tpu_custom_call.1} parent=1 // pred_check
      _
    $region11: #{tpu_custom_call.1} parent=1 // pred_check_branch
      %35 = sbr.rel (0) target = $region13
    $region12: #{tpu_custom_call.1} parent=1 // pred_region
      %36 = dma.done [#allocation3], 256
    $region13: #{tpu_custom_call.1} parent=1 // pred_fallthru
      _
    // Predicated region
    $region14: #{tpu_custom_call.1} parent=1 // pred_check
      _
    $region15: #{tpu_custom_call.1} parent=1 // pred_check_branch
      %38 = sbr.rel (0) target = $region17
    $region16: #{tpu_custom_call.1} parent=1 // pred_region
      %39 = dma.done [#allocation6], 256
    $region17: #{tpu_custom_call.1} parent=1 // pred_fallthru
      _
    %v40 = vld [vmem:[#allocation2] sm:$0xff]
    %v41 = vld [vmem:[#allocation2 + $0x8] sm:$0xff]
    %v42 = vld [vmem:[#allocation5] sm:$0xff]
    %v43 = vld [vmem:[#allocation5 + $0x8] sm:$0xff]
    %vm44 = vcmask 261120
    %v45 = vsel %vm44, %v40, -inf
    %46 = vmax.xlane.f32.xlu0 %v45
    %v47 = vpop.xlane.xlu0 %46
    %v48 = vsel %vm44, %v41, -inf
    %49 = vmax.xlane.f32.xlu0 %v48
    %v50 = vpop.xlane.xlu0 %49
    %v51 = vsub.f32 %v40, %v47
    %v52 = vsub.f32 %v41, %v50
    %v53 = vsel %vm44, %v51, 0.0
    %54 = vadd.xlane.f32.xlu0 %v53
    %v55 = vpop.xlane.xlu0 %54
    %v56 = vsel %vm44, %v52, 0.0
    %57 = vadd.xlane.f32.xlu0 %v56
    %v58 = vpop.xlane.xlu0 %57
    %v59 = vmul.f32 %v51, 1.442695
    %v60 = vpow.pop %v59
    %v61 = vmul.f32 %v52, 1.442695
    %v62 = vpow.pop %v61
    %v63 = vsel %vm44, %v60, 0.0
    %64 = vadd.xlane.f32.xlu0 %v63
    %v65 = vpop.xlane.xlu0 %64
    %v66 = vsel %vm44, %v62, 0.0
    %67 = vadd.xlane.f32.xlu0 %v66
    %v68 = vpop.xlane.xlu0 %67
    %v69 = vlog2.pop %v65
    %v70 = vmul.f32 %v69, 0.6931472
    %v71 = vlog2.pop %v68
    %v72 = vmul.f32 %v71, 0.6931472
    %v73 = vsub.f32 %v51, %v70
    %v74 = vsub.f32 %v52, %v72
    %v75 = vmul.f32 %v73, %v42
    %v76 = vmul.f32 %v74, %v43
    %v77 = vsel %vm44, %v75, 0.0
    %78 = vadd.xlane.f32.xlu0 %v77
    %v79 = vpop.xlane.xlu0 %78
    %v80 = vsel %vm44, %v76, 0.0
    %81 = vadd.xlane.f32.xlu0 %v80
    %v82 = vpop.xlane.xlu0 %81
    %v83 = vsub.f32 0.0, %v79
    %v84 = vsub.f32 0.0, %v82
    %v85 = vmul.f32 %v55, 0.03125
    %v86 = vmul.f32 %v58, 0.03125
    %v87 = vsub.f32 %v70, %v85
    %v88 = vsub.f32 %v72, %v86
    %v89 = vmul.f32 %v83, 0.9
    %v90 = vmul.f32 %v84, 0.9
    %v91 = vmul.f32 %v87, 0.1
    %v92 = vmul.f32 %v88, 0.1
    %v93 = vadd.f32 %v89, %v91
    %v94 = vadd.f32 %v90, %v92
    %v95 = vadd.f32 %v93, %v94
    %v96 = vrot.slane %v95, 4
    %v97 = vadd.f32 %v95, %v96
    %v98 = vrot.slane %v97, 2
    %v99 = vadd.f32 %v97, %v98
    %v100 = vrot.slane %v99, 1
    %v101 = vadd.f32 %v99, %v100
    %102 = vst [vmem:[#allocation7] sm:$0x1] %v101
    // Predicated region
    $region18: #{tpu_custom_call.1} parent=1 // pred_check
      _
    $region19: #{tpu_custom_call.1} parent=1 // pred_check_branch
      %104 = sbr.rel (0) target = $region21
    $region20: #{tpu_custom_call.1} parent=1 // pred_region
      %s106 = ssub.s32 16, 16
      %107 = vsyncadd [#allocation4], %s106
      %s109 = sshll.u32 [#allocation7], 4
      %s110 = int_to_ptr.vmem [resolvable:$true] %s109
      %112 = dma.vmem_to_hbm [thread:$0]  %s110, 16, %s2, [#allocation4]
    $region21: #{tpu_custom_call.1} parent=1 // pred_fallthru
      _
    // Predicated region
    $region22: #{tpu_custom_call.1} parent=1 // pred_check
      _
    $region23: #{tpu_custom_call.1} parent=1 // pred_check_branch
      %114 = sbr.rel (0) target = $region25
    $region24: #{tpu_custom_call.1} parent=1 // pred_region
      %115 = dma.done [#allocation4], 16
    $region25: #{tpu_custom_call.1} parent=1 // pred_fallthru
      _
    %116 = vsyncpa [#allocation3], 1
    %117 = vsyncpa [#allocation6], 1
    %118 = vsyncpa [#allocation4], 1

</llo_original>
